<compile_context>
chip_gen: v6e
topology: v6e:2x2x1
jax: 0.10.0
libtpu: 0.0.40
codegen_flags: <defaults>
</compile_context>

<pallas_src>
import functools

import jax
import jax.numpy as jnp
from jax.experimental import pallas as pl
from jax.experimental.pallas import tpu as pltpu

_NEG = -1e9  # sigmoid(_NEG) == 0.0 exactly -> emulates "pad after sigmoid"


# ------------------------------ Pallas kernels -------------------------------

def _conv1_kernel(w1T_ref, a1T_ref, oT_ref):
    """oT = sigmoid( W1T @ sigmoid(A1T) ).  Grid = (M tiles, K tiles)."""
    k = pl.program_id(1)

    @pl.when(k == 0)
    def _():
        oT_ref[...] = jnp.zeros_like(oT_ref)

    oT_ref[...] += jnp.dot(w1T_ref[...], jax.nn.sigmoid(a1T_ref[...]),
                           preferred_element_type=jnp.float32)

    @pl.when(k == pl.num_programs(1) - 1)
    def _():
        oT_ref[...] = jax.nn.sigmoid(oT_ref[...])


def _conv2_ds_kernel(w2T_ref, a2T_ref, wdT_ref, xsT_ref, oT_ref):
    """oT = W2T @ A2T + WdT @ XsT   (conv2 + 1x1 downsample residual fused)."""
    k = pl.program_id(1)

    @pl.when(k == 0)
    def _():
        oT_ref[...] = jnp.dot(wdT_ref[...], xsT_ref[...],
                              preferred_element_type=jnp.float32)

    oT_ref[...] += jnp.dot(w2T_ref[...], a2T_ref[...],
                           preferred_element_type=jnp.float32)


def _conv2_id_kernel(w2T_ref, a2T_ref, resT_ref, oT_ref):
    """oT = W2T @ A2T + resT   (identity residual, stride == 1)."""
    k = pl.program_id(1)

    @pl.when(k == 0)
    def _():
        oT_ref[...] = resT_ref[...].astype(jnp.float32)

    oT_ref[...] += jnp.dot(w2T_ref[...], a2T_ref[...],
                           preferred_element_type=jnp.float32)


# ------------------------------ Pallas wrappers -------------------------------

def _round_up(x, m):
    return (x + m - 1) // m * m


def _pick_tk(kdim):
    """Reduction tile: full K when small, else a 128-multiple divisor of 9*C."""
    if kdim <= 2304:
        return kdim
    for cand in (2304, 1152):
        if kdim % cand == 0:
            return cand
    return kdim


def _compiler_params():
    return pltpu.CompilerParams(
        dimension_semantics=("parallel", "arbitrary"),
        vmem_limit_bytes=48 * 1024 * 1024)  # safe on v5e/v6e (128 MiB) and v7x (64 MiB)


def _fused_conv1(w1T, a1T, tm):
    cout, kdim = w1T.shape
    _, mpad = a1T.shape
    tk = _pick_tk(kdim)
    grid = (mpad // tm, kdim // tk)
    return pl.pallas_call(
        _conv1_kernel,
        out_shape=jax.ShapeDtypeStruct((cout, mpad), jnp.float32),
        grid=grid,
        in_specs=[pl.BlockSpec((cout, tk), lambda i, k: (0, k)),
                  pl.BlockSpec((tk, tm), lambda i, k: (k, i))],
        out_specs=pl.BlockSpec((cout, tm), lambda i, k: (0, i)),
        compiler_params=_compiler_params(),
    )(w1T, a1T)


def _fused_conv2_ds(w2T, a2T, wdT, xsT, tm):
    cout, kdim = w2T.shape
    _, mpad = a2T.shape
    cin = wdT.shape[1]
    tk = _pick_tk(kdim)
    grid = (mpad // tm, kdim // tk)
    return pl.pallas_call(
        _conv2_ds_kernel,
        out_shape=jax.ShapeDtypeStruct((cout, mpad), jnp.float32),
        grid=grid,
        in_specs=[pl.BlockSpec((cout, tk), lambda i, k: (0, k)),
                  pl.BlockSpec((tk, tm), lambda i, k: (k, i)),
                  pl.BlockSpec((cout, cin), lambda i, k: (0, 0)),
                  pl.BlockSpec((cin, tm), lambda i, k: (0, i))],
        out_specs=pl.BlockSpec((cout, tm), lambda i, k: (0, i)),
        compiler_params=_compiler_params(),
    )(w2T, a2T, wdT, xsT)


def _fused_conv2_id(w2T, a2T, resT, tm):
    cout, kdim = w2T.shape
    _, mpad = a2T.shape
    cres = resT.shape[0]
    tk = _pick_tk(kdim)
    grid = (mpad // tm, kdim // tk)
    return pl.pallas_call(
        _conv2_id_kernel,
        out_shape=jax.ShapeDtypeStruct((cout, mpad), jnp.float32),
        grid=grid,
        in_specs=[pl.BlockSpec((cout, tk), lambda i, k: (0, k)),
                  pl.BlockSpec((tk, tm), lambda i, k: (k, i)),
                  pl.BlockSpec((cres, tm), lambda i, k: (0, i))],
        out_specs=pl.BlockSpec((cout, tm), lambda i, k: (0, i)),
        compiler_params=_compiler_params(),
    )(w2T, a2T, resT)


# --------------------------------- JAX glue -----------------------------------

def _im2col_T(x_c, stride, pad_value):
    """x_c: [C, N, H, W] -> [9*C, N*Ho*Wo] for a 3x3 / pad=1 conv.

    K index ordering = c*9 + dy*3 + dx, matching w.reshape(Cout, Cin*9)."""
    c, n, h, w = x_c.shape
    xp = jnp.pad(x_c, ((0, 0), (0, 0), (1, 1), (1, 1)), constant_values=pad_value)
    ho = (h - 1) // stride + 1
    wo = (w - 1) // stride + 1
    taps = []
    for dy in range(3):
        for dx in range(3):
            taps.append(xp[:, :, dy:dy + stride * (ho - 1) + 1:stride,
                              dx:dx + stride * (wo - 1) + 1:stride])
    a = jnp.stack(taps, axis=1)                       # [C, 9, N, Ho, Wo]
    return a.reshape(c * 9, n * ho * wo)


def _pad_cols(a, mpad):
    m = a.shape[-1]
    if m == mpad:
        return a
    return jnp.pad(a, ((0, 0), (0, mpad - m)))


def preact_basic_block(x_nchw, params, stride):
    """Pallas implementation of PreActBasicBlock.forward. NCHW in / NCHW out."""
    w1, w2, wd = params["conv1"], params["conv2"], params["downsample"]
    x = x_nchw.astype(jnp.float32)
    n, cin, h, w_ = x.shape
    cout = w1.shape[0]

    ho = (h - 1) // stride + 1
    wo = (w_ - 1) // stride + 1
    m = n * ho * wo
    tm = min(512, _round_up(m, 128))     # lane tile (multiple of 128)
    mpad = _round_up(m, tm)              # pad M so the grid always pipelines

    # channels-leading layout [C, N, H, W]: M = N*Ho*Wo lands on the lane axis.
    x_c = jnp.transpose(x, (1, 0, 2, 3))

    # ---- kernel 1: sigmoid(x) + conv1 (3x3, stride) + sigmoid, all fused ----
    a1T = _pad_cols(_im2col_T(x_c, stride, pad_value=_NEG), mpad)   # [9*Cin, Mpad]
    w1T = w1.reshape(cout, cin * 9).astype(jnp.float32)             # [Cout, 9*Cin]
    s2T = _fused_conv1(w1T, a1T, tm)                                # [Cout, Mpad]

    # ---- kernel 2: conv2 (3x3, stride 1) + residual (1x1 downsample) fused ----
    s2_c = s2T[:, :m].reshape(cout, n, ho, wo)
    a2T = _pad_cols(_im2col_T(s2_c, 1, pad_value=0.0), mpad)        # [9*Cout, Mpad]
    w2T = w2.reshape(cout, cout * 9).astype(jnp.float32)

    if wd is not None:
        wdT = wd[:, :, 0, 0].astype(jnp.float32)                    # [Cout, Cin]
        xsT = _pad_cols(x_c[:, :, ::stride, ::stride].reshape(cin, m), mpad)
        outT = _fused_conv2_ds(w2T, a2T, wdT, xsT, tm)
    else:
        assert stride == 1, "identity residual requires stride == 1 (as in PyTorch)"
        resT = _pad_cols(x_c.reshape(cin, m), mpad)
        outT = _fused_conv2_id(w2T, a2T, resT, tm)

    out = outT[:, :m].reshape(cout, n, ho, wo)
    return jnp.transpose(out, (1, 0, 2, 3))                         # -> NCHW


# --------------------------- reference (pure JAX) -----------------------------

def _ref_forward(x, params, stride):
    dn = ("NCHW", "OIHW", "NCHW")
    hp = jax.lax.Precision.HIGHEST
    if params["downsample"] is not None:
        res = jax.lax.conv_general_dilated(
            x, params["downsample"], (stride, stride), "VALID",
            dimension_numbers=dn, precision=hp)
    else:
        res = x
    out = jax.nn.sigmoid(x)
    out = jax.lax.conv_general_dilated(
        out, params["conv1"], (stride, stride), ((1, 1), (1, 1)),
        dimension_numbers=dn, precision=hp)
    out = jax.nn.sigmoid(out)
    out = jax.lax.conv_general_dilated(
        out, params["conv2"], (1, 1), ((1, 1), (1, 1)),
        dimension_numbers=dn, precision=hp)
    return out + res


# ---------------------------------- main --------------------------------------

if __name__ == "__main__":
    in_planes, out_planes, stride = 4, 8, 2
    key = jax.random.PRNGKey(0)
    kx, k1, k2, kd = jax.random.split(key, 4)

    x = jax.random.normal(kx, (2, in_planes, 16, 16), dtype=jnp.float32)

    params = {
        "conv1": 0.1 * jax.random.normal(k1, (out_planes, in_planes, 3, 3), jnp.float32),
        "conv2": 0.1 * jax.random.normal(k2, (out_planes, out_planes, 3, 3), jnp.float32),
        "downsample": (0.1 * jax.random.normal(kd, (out_planes, in_planes, 1, 1), jnp.float32)
                       if in_planes != out_planes else None),
    }

    fwd = jax.jit(functools.partial(preact_basic_block, stride=stride))
    out = jax.block_until_ready(fwd(x, params))

    ref = jax.block_until_ready(_ref_forward(x, params, stride))
    assert out.shape == ref.shape == (2, out_planes, 8, 8), (out.shape, ref.shape)
    max_err = float(jnp.max(jnp.abs(out - ref)))
    # default (single-pass bf16) MXU precision vs HIGHEST-precision reference
    assert jnp.allclose(out, ref, atol=2e-2, rtol=2e-2), max_err

    print("KERNEL_OK")
</pallas_src>

<mosaic_0001>
module attributes {stable_mosaic.version = 11 : i64} {
  func.func @_conv1_kernel(%arg0: i32, %arg1: i32, %arg2: memref<8x36xf32, #tpu.memory_space<vmem>>, %arg3: memref<36x128xf32, #tpu.memory_space<vmem>>, %arg4: memref<8x128xf32, #tpu.memory_space<vmem>>) attributes {dimension_semantics = [#tpu.dimension_semantics<parallel>, #tpu.dimension_semantics<arbitrary>], iteration_bounds = array<i64: 1, 1>, scalar_prefetch = 0 : i64, scratch_operands = 0 : i64, tpu.core_type = #tpu.core_type<tc>, window_params = [{transform_indices = @transform_0, window_bounds = array<i64: 8, 36>}, {transform_indices = @transform_1, window_bounds = array<i64: 36, 128>}, {transform_indices = @transform_2, window_bounds = array<i64: 8, 128>}]} {
    %c0_i32 = arith.constant 0 : i32
    %0 = arith.cmpi eq, %arg1, %c0_i32 : i32
    %1 = arith.extui %0 : i1 to i32
    %c0_i32_0 = arith.constant 0 : i32
    %2 = arith.cmpi ne, %1, %c0_i32_0 : i32
    scf.if %2 {
      %cst_11 = arith.constant 0.000000e+00 : f32
      %17 = vector.broadcast %cst_11 : f32 to vector<8x128xf32>
      %c0_12 = arith.constant 0 : index
      %c0_13 = arith.constant 0 : index
      %18 = vector.load %arg4[%c0_12, %c0_13] : memref<8x128xf32, #tpu.memory_space<vmem>>, vector<8x128xf32>
      tpu.vector_store %arg4[%c0_12, %c0_13], %17 {strides = array<i32>} : memref<8x128xf32, #tpu.memory_space<vmem>>, vector<8x128xf32>,
    } else {
    }
    %c0 = arith.constant 0 : index
    %c0_1 = arith.constant 0 : index
    %3 = vector.load %arg4[%c0, %c0_1] : memref<8x128xf32, #tpu.memory_space<vmem>>, vector<8x128xf32>
    %c0_2 = arith.constant 0 : index
    %c0_3 = arith.constant 0 : index
    %4 = vector.load %arg2[%c0_2, %c0_3] : memref<8x36xf32, #tpu.memory_space<vmem>>, vector<8x36xf32>
    %c0_4 = arith.constant 0 : index
    %c0_5 = arith.constant 0 : index
    %5 = vector.load %arg3[%c0_4, %c0_5] : memref<36x128xf32, #tpu.memory_space<vmem>>, vector<36x128xf32>
    %6 = arith.negf %5 : vector<36x128xf32>
    %7 = math.exp %6 : vector<36x128xf32>
    %cst = arith.constant 1.000000e+00 : f32
    %8 = vector.broadcast %cst : f32 to vector<36x128xf32>
    %9 = arith.addf %8, %7 : vector<36x128xf32>
    %10 = arith.divf %8, %9 : vector<36x128xf32>
    %cst_6 = arith.constant dense<0.000000e+00> : vector<8x128xf32>
    %11 = tpu.matmul %4, %10, %cst_6 {dimension_numbers = #tpu.dot_dimension_numbers<[1], [0], [0], [1], [0, 0, 1, 1], [], []>} : vector<8x36xf32>, vector<36x128xf32>, vector<8x128xf32> -> vector<8x128xf32>
    %12 = arith.addf %3, %11 : vector<8x128xf32>
    %c0_7 = arith.constant 0 : index
    %c0_8 = arith.constant 0 : index
    %13 = vector.load %arg4[%c0_7, %c0_8] : memref<8x128xf32, #tpu.memory_space<vmem>>, vector<8x128xf32>
    tpu.vector_store %arg4[%c0_7, %c0_8], %12 {strides = array<i32>} : memref<8x128xf32, #tpu.memory_space<vmem>>, vector<8x128xf32>,
    %c0_i32_9 = arith.constant 0 : i32
    %14 = arith.cmpi eq, %arg1, %c0_i32_9 : i32
    %15 = arith.extui %14 : i1 to i32
    %c0_i32_10 = arith.constant 0 : i32
    %16 = arith.cmpi ne, %15, %c0_i32_10 : i32
    scf.if %16 {
      %c0_11 = arith.constant 0 : index
      %c0_12 = arith.constant 0 : index
      %17 = vector.load %arg4[%c0_11, %c0_12] : memref<8x128xf32, #tpu.memory_space<vmem>>, vector<8x128xf32>
      %18 = arith.negf %17 : vector<8x128xf32>
      %19 = math.exp %18 : vector<8x128xf32>
      %cst_13 = arith.constant 1.000000e+00 : f32
      %20 = vector.broadcast %cst_13 : f32 to vector<8x128xf32>
      %21 = arith.addf %20, %19 : vector<8x128xf32>
      %22 = arith.divf %20, %21 : vector<8x128xf32>
      %c0_14 = arith.constant 0 : index
      %c0_15 = arith.constant 0 : index
      %23 = vector.load %arg4[%c0_14, %c0_15] : memref<8x128xf32, #tpu.memory_space<vmem>>, vector<8x128xf32>
      tpu.vector_store %arg4[%c0_14, %c0_15], %22 {strides = array<i32>} : memref<8x128xf32, #tpu.memory_space<vmem>>, vector<8x128xf32>,
    } else {
    }
    return
  }
  func.func @transform_0(%arg0: i32, %arg1: i32) -> (i32, i32) {
    %c0_i32 = arith.constant 0 : i32
    %c0_i32_0 = arith.constant 0 : i32
    return %c0_i32, %arg1 : i32, i32
  }
  func.func @transform_1(%arg0: i32, %arg1: i32) -> (i32, i32) {
    %c0_i32 = arith.constant 0 : i32
    return %arg1, %arg0 : i32, i32
  }
  func.func @transform_2(%arg0: i32, %arg1: i32) -> (i32, i32) {
    %c0_i32 = arith.constant 0 : i32
    %c0_i32_0 = arith.constant 0 : i32
    return %c0_i32, %arg0 : i32, i32
  }
}

module attributes {stable_mosaic.version = 11 : i64} {
  func.func @_conv2_ds_kernel(%arg0: i32, %arg1: i32, %arg2: memref<8x72xf32, #tpu.memory_space<vmem>>, %arg3: memref<72x128xf32, #tpu.memory_space<vmem>>, %arg4: memref<8x4xf32, #tpu.memory_space<vmem>>, %arg5: memref<4x128xf32, #tpu.memory_space<vmem>>, %arg6: memref<8x128xf32, #tpu.memory_space<vmem>>) attributes {dimension_semantics = [#tpu.dimension_semantics<parallel>, #tpu.dimension_semantics<arbitrary>], iteration_bounds = array<i64: 1, 1>, scalar_prefetch = 0 : i64, scratch_operands = 0 : i64, tpu.core_type = #tpu.core_type<tc>, window_params = [{transform_indices = @transform_0, window_bounds = array<i64: 8, 72>}, {transform_indices = @transform_1, window_bounds = array<i64: 72, 128>}, {pipeline_mode = #tpu.pipeline_mode<synchronous>, transform_indices = @transform_2, window_bounds = array<i64: 8, 4>}, {transform_indices = @transform_3, window_bounds = array<i64: 4, 128>}, {transform_indices = @transform_4, window_bounds = array<i64: 8, 128>}]} {
    %c0_i32 = arith.constant 0 : i32
    %0 = arith.cmpi eq, %arg1, %c0_i32 : i32
    %1 = arith.extui %0 : i1 to i32
    %c0_i32_0 = arith.constant 0 : i32
    %2 = arith.cmpi ne, %1, %c0_i32_0 : i32
    scf.if %2 {
      %c0_8 = arith.constant 0 : index
      %c0_9 = arith.constant 0 : index
      %9 = vector.load %arg4[%c0_8, %c0_9] : memref<8x4xf32, #tpu.memory_space<vmem>>, vector<8x4xf32>
      %c0_10 = arith.constant 0 : index
      %c0_11 = arith.constant 0 : index
      %10 = vector.load %arg5[%c0_10, %c0_11] : memref<4x128xf32, #tpu.memory_space<vmem>>, vector<4x128xf32>
      %cst_12 = arith.constant dense<0.000000e+00> : vector<8x128xf32>
      %11 = tpu.matmul %9, %10, %cst_12 {dimension_numbers = #tpu.dot_dimension_numbers<[1], [0], [0], [1], [0, 0, 1, 1], [], []>} : vector<8x4xf32>, vector<4x128xf32>, vector<8x128xf32> -> vector<8x128xf32>
      %c0_13 = arith.constant 0 : index
      %c0_14 = arith.constant 0 : index
      %12 = vector.load %arg6[%c0_13, %c0_14] : memref<8x128xf32, #tpu.memory_space<vmem>>, vector<8x128xf32>
      tpu.vector_store %arg6[%c0_13, %c0_14], %11 {strides = array<i32>} : memref<8x128xf32, #tpu.memory_space<vmem>>, vector<8x128xf32>,
    } else {
    }
    %c0 = arith.constant 0 : index
    %c0_1 = arith.constant 0 : index
    %3 = vector.load %arg6[%c0, %c0_1] : memref<8x128xf32, #tpu.memory_space<vmem>>, vector<8x128xf32>
    %c0_2 = arith.constant 0 : index
    %c0_3 = arith.constant 0 : index
    %4 = vector.load %arg2[%c0_2, %c0_3] : memref<8x72xf32, #tpu.memory_space<vmem>>, vector<8x72xf32>
    %c0_4 = arith.constant 0 : index
    %c0_5 = arith.constant 0 : index
    %5 = vector.load %arg3[%c0_4, %c0_5] : memref<72x128xf32, #tpu.memory_space<vmem>>, vector<72x128xf32>
    %cst = arith.constant dense<0.000000e+00> : vector<8x128xf32>
    %6 = tpu.matmul %4, %5, %cst {dimension_numbers = #tpu.dot_dimension_numbers<[1], [0], [0], [1], [0, 0, 1, 1], [], []>} : vector<8x72xf32>, vector<72x128xf32>, vector<8x128xf32> -> vector<8x128xf32>
    %7 = arith.addf %3, %6 : vector<8x128xf32>
    %c0_6 = arith.constant 0 : index
    %c0_7 = arith.constant 0 : index
    %8 = vector.load %arg6[%c0_6, %c0_7] : memref<8x128xf32, #tpu.memory_space<vmem>>, vector<8x128xf32>
    tpu.vector_store %arg6[%c0_6, %c0_7], %7 {strides = array<i32>} : memref<8x128xf32, #tpu.memory_space<vmem>>, vector<8x128xf32>,
    return
  }
  func.func @transform_0(%arg0: i32, %arg1: i32) -> (i32, i32) {
    %c0_i32 = arith.constant 0 : i32
    %c0_i32_0 = arith.constant 0 : i32
    return %c0_i32, %arg1 : i32, i32
  }
  func.func @transform_1(%arg0: i32, %arg1: i32) -> (i32, i32) {
    %c0_i32 = arith.constant 0 : i32
    return %arg1, %arg0 : i32, i32
  }
  func.func @transform_2(%arg0: i32, %arg1: i32) -> (i32, i32) {
    %c0_i32 = arith.constant 0 : i32
    %c0_i32_0 = arith.constant 0 : i32
    %c0_i32_1 = arith.constant 0 : i32
    return %c0_i32, %c0_i32_0 : i32, i32
  }
  func.func @transform_3(%arg0: i32, %arg1: i32) -> (i32, i32) {
    %c0_i32 = arith.constant 0 : i32
    %c0_i32_0 = arith.constant 0 : i32
    return %c0_i32, %arg0 : i32, i32
  }
  func.func @transform_4(%arg0: i32, %arg1: i32) -> (i32, i32) {
    %c0_i32 = arith.constant 0 : i32
    %c0_i32_0 = arith.constant 0 : i32
    return %c0_i32, %arg0 : i32, i32
  }
}

</mosaic_0001>

<llo_original>
// kernel: preact_basic_block.2
$region0: #{preact_basic_block.2}
  #allocation0 [shape = 'u32[]', space=smem, size = 0x4, offset = 0x4, fixed_abs, tag = 'smem constant byte address 0x4 - core index']
  #allocation1 [shape = 'u32[144,128]{1,0:T(1,128)}', space=vmem, size = 0x12000, scoped, tag = 'internal scratch']
  %s0 = inlined_call_operand.vmem [shape: f32[8,36], index: 0, kind: input, shape index: {}]
  %s1 = inlined_call_operand.vmem [shape: f32[36,128], index: 1, kind: input, shape index: {}]
  %s2 = inlined_call_operand.vmem [shape: f32[8,128], index: 2, kind: output, shape index: {}]
  %s3 = sld [smem:[#allocation0]]
  $region26: #{preact_basic_block.2} parent=0
    _
  %s5 = ssub.s32 1, %s3
  %s6 = scalar_select 0, %s5, %s3
  // Predicated region
  $region2: #{preact_basic_block.2} parent=0 // pred_check
    _
  $region3: #{preact_basic_block.2} parent=0 // pred_check_branch
    %8 = sbr.rel (0) target = $region5
  $region4: #{preact_basic_block.2} parent=0 // pred_region
    _
  $region5: #{preact_basic_block.2} parent=0 // pred_fallthru
    _
  // Predicated region
  $region6: #{preact_basic_block.2} parent=0 // pred_check
    _
  $region7: #{preact_basic_block.2} parent=0 // pred_check_branch
    %10 = sbr.rel (0) target = $region9
  $region8: #{preact_basic_block.2} parent=0 // pred_region
    _
  $region9: #{preact_basic_block.2} parent=0 // pred_fallthru
    _
  %p11 = scmp.eq.s32.totalorder 0, 0
  // Predicated region
  $region10: #{preact_basic_block.2} parent=0 // pred_check
    %p12 = pneg %p11
  $region11: #{preact_basic_block.2} parent=0 // pred_check_branch
    %14 = sbr.rel (%p12) target = $region13
  $region12: #{preact_basic_block.2} parent=0 // pred_region
    %15 = vst [vmem:[%s2] sm:$0xff] 0.0
  $region13: #{preact_basic_block.2} parent=0 // pred_fallthru
    _
  %v16 = vld [vmem:[%s2] sm:$0xff]
  %v17 = vld [vmem:[%s0] sm:$0xff]
  %v18 = vld [vmem:[%s1] sm:$0xff]
  %v19 = vld [vmem:[%s1 + $0x8] sm:$0xff]
  %v20 = vld [vmem:[%s1 + $0x10] sm:$0xff]
  %v21 = vld [vmem:[%s1 + $0x18] sm:$0xff]
  %v22 = vld [vmem:[%s1 + $0x20] sm:$0xf]
  %v23 = vxor.u32 %v18, 2147483648
  %v24 = vxor.u32 %v19, 2147483648
  %v25 = vxor.u32 %v20, 2147483648
  %v26 = vxor.u32 %v21, 2147483648
  %v27 = vxor.u32 %v22, 2147483648
  %v28 = vmul.f32 %v23, 1.442695
  %v29 = vpow.pop %v28
  %v30 = vmul.f32 %v24, 1.442695
  %v31 = vpow.pop %v30
  %v32 = vmul.f32 %v25, 1.442695
  %v33 = vpow.pop %v32
  %v34 = vmul.f32 %v26, 1.442695
  %v35 = vpow.pop %v34
  %v36 = vmul.f32 %v27, 1.442695
  %v37 = vpow.pop %v36
  %v38 = vadd.f32 %v29, 1.0
  %v39 = vadd.f32 %v31, 1.0
  %v40 = vadd.f32 %v33, 1.0
  %v41 = vadd.f32 %v35, 1.0
  %v42 = vadd.f32 %v37, 1.0
  %v43 = vrcp.pop %v38
  %v44 = vmul.f32 1.0, %v43
  %v45 = vrcp.pop %v39
  %v46 = vmul.f32 1.0, %v45
  %v47 = vrcp.pop %v40
  %v48 = vmul.f32 1.0, %v47
  %v49 = vrcp.pop %v41
  %v50 = vmul.f32 1.0, %v49
  %v51 = vrcp.pop %v42
  %v52 = vmul.f32 1.0, %v51
  %vm53 = vcmask 293888
  %v55 = vsel %vm53, %v17, 0
  %vm57 = vcmask 1043456
  %v59 = vsel %vm57, %v52, 0
  %61 = vmatprep.subr.mxu0 0.0
  %62 = vmatpush1.msra.mxu0 0.0
  %63 = vmatprep.subr.mxu0 0.0
  %64 = vmatpush1.msra.mxu0 0.0
  %65 = vmatprep.subr.mxu0 0.0
  %66 = vmatpush1.msra.mxu0 0.0
  %67 = vmatprep.subr.mxu0 0.0
  %68 = vmatpush1.msra.mxu0 0.0
  %69 = vmatprep.subr.mxu0 0.0
  %70 = vmatpush1.msra.mxu0 0.0
  %71 = vmatprep.subr.mxu0 0.0
  %72 = vmatpush1.msra.mxu0 0.0
  %73 = vmatprep.subr.mxu0 0.0
  %74 = vmatpush1.msra.mxu0 0.0
  %75 = vmatprep.subr.mxu0 0.0
  %76 = vmatpush1.msra.mxu0 0.0
  %77 = vmatprep.subr.mxu0 0.0
  %78 = vmatpush1.msra.mxu0 0.0
  %79 = vmatprep.subr.mxu0 0.0
  %80 = vmatpush1.msra.mxu0 0.0
  %81 = vmatprep.subr.mxu0 0.0
  %82 = vmatpush1.msra.mxu0 0.0
  %83 = vmatprep.subr.mxu0 0.0
  %84 = vmatpush1.msra.mxu0 %v59
  %85 = vmatprep.subr.mxu0 0.0
  %86 = vmatpush1.msra.mxu0 %v50
  %87 = vmatprep.subr.mxu0 0.0
  %88 = vmatpush1.msra.mxu0 %v48
  %89 = vmatprep.subr.mxu0 0.0
  %90 = vmatpush1.msra.mxu0 %v46
  %91 = vmatprep.subr.mxu0 0.0
  %92 = vmatpush1.msra.mxu0 %v44
  %93 = vmatprep.subr.mxu0 0.0
  %94 = vmatpush2.msra.mxu0 0.0
  %95 = vmatprep.subr.mxu0 0.0
  %96 = vmatpush2.msra.mxu0 0.0
  %97 = vmatprep.subr.mxu0 0.0
  %98 = vmatpush2.msra.mxu0 0.0
  %99 = vmatprep.subr.mxu0 0.0
  %100 = vmatpush2.msra.mxu0 0.0
  %101 = vmatprep.subr.mxu0 0.0
  %102 = vmatpush2.msra.mxu0 0.0
  %103 = vmatprep.subr.mxu0 0.0
  %104 = vmatpush2.msra.mxu0 0.0
  %105 = vmatprep.subr.mxu0 0.0
  %106 = vmatpush2.msra.mxu0 0.0
  %107 = vmatprep.subr.mxu0 0.0
  %108 = vmatpush2.msra.mxu0 0.0
  %109 = vmatprep.subr.mxu0 0.0
  %110 = vmatpush2.msra.mxu0 0.0
  %111 = vmatprep.subr.mxu0 0.0
  %112 = vmatpush2.msra.mxu0 0.0
  %113 = vmatprep.subr.mxu0 0.0
  %114 = vmatpush2.msra.mxu0 0.0
  %115 = vmatprep.subr.mxu0 0.0
  %116 = vmatpush2.msra.mxu0 0.0
  %117 = vmatprep.subr.mxu0 0.0
  %118 = vmatpush2.msra.mxu0 0.0
  %119 = vmatprep.subr.mxu0 0.0
  %120 = vmatpush2.msra.mxu0 0.0
  %121 = vmatprep.subr.mxu0 0.0
  %122 = vmatpush2.msra.mxu0 0.0
  %123 = vmatprep.subr.mxu0 0.0
  %124 = vmatpush2.msra.mxu0 0.0
  %125 = vmatprep.mubr.f32.mxu0 0.0
  %126 = vmatmul.mubr.f32.gmra.mxu0 %v55
  %v127 = vpop.f32.mrf.mxu0
  %v128 = vadd.f32 0.0, %v127
  %v129 = vpop.f32.mrf.mxu0
  %130 = vdwg.mxu0
  %v131 = vadd.f32 %v16, %v128
  %132 = vst [vmem:[%s2] sm:$0xff] %v131
  // Predicated region
  $region14: #{preact_basic_block.2} parent=0 // pred_check
    %p133 = pneg %p11
  $region15: #{preact_basic_block.2} parent=0 // pred_check_branch
    %135 = sbr.rel (%p133) target = $region17
  $region16: #{preact_basic_block.2} parent=0 // pred_region
    %v136 = vld [vmem:[%s2] sm:$0xff]
    %v137 = vxor.u32 %v136, 2147483648
    %v138 = vmul.f32 %v137, 1.442695
    %v139 = vpow.pop %v138
    %v140 = vadd.f32 %v139, 1.0
    %v141 = vrcp.pop %v140
    %v142 = vmul.f32 1.0, %v141
    %143 = vst [vmem:[%s2] sm:$0xff] %v142
  $region17: #{preact_basic_block.2} parent=0 // pred_fallthru
    _
  // Predicated region
  $region18: #{preact_basic_block.2} parent=0 // pred_check
    _
  $region19: #{preact_basic_block.2} parent=0 // pred_check_branch
    %145 = sbr.rel (0) target = $region21
  $region20: #{preact_basic_block.2} parent=0 // pred_region
    _
  $region21: #{preact_basic_block.2} parent=0 // pred_fallthru
    _
  // Predicated region
  $region22: #{preact_basic_block.2} parent=0 // pred_check
    _
  $region23: #{preact_basic_block.2} parent=0 // pred_check_branch
    %147 = sbr.rel (0) target = $region25
  $region24: #{preact_basic_block.2} parent=0 // pred_region
    _
  $region25: #{preact_basic_block.2} parent=0 // pred_fallthru
    _

// kernel: preact_basic_block.3
$region0: #{preact_basic_block.3}
  #allocation0 [shape = 'u32[]', space=smem, size = 0x4, offset = 0x4, fixed_abs, tag = 'smem constant byte address 0x4 - core index']
  #allocation1 [shape = 'u32[144,128]{1,0:T(1,128)}', space=vmem, size = 0x12000, scoped, tag = 'internal scratch']
  %s0 = inlined_call_operand.vmem [shape: f32[8,72], index: 0, kind: input, shape index: {}]
  %s1 = inlined_call_operand.vmem [shape: f32[72,128], index: 1, kind: input, shape index: {}]
  %s2 = inlined_call_operand.vmem [shape: f32[8,4], index: 2, kind: input, shape index: {}]
  %s3 = inlined_call_operand.vmem [shape: f32[4,128], index: 3, kind: input, shape index: {}]
  %s4 = inlined_call_operand.vmem [shape: f32[8,128], index: 4, kind: output, shape index: {}]
  %s5 = sld [smem:[#allocation0]]
  $region30: #{preact_basic_block.3} parent=0
    _
  %s7 = ssub.s32 1, %s5
  %s8 = scalar_select 0, %s7, %s5
  // Predicated region
  $region2: #{preact_basic_block.3} parent=0 // pred_check
    _
  $region3: #{preact_basic_block.3} parent=0 // pred_check_branch
    %10 = sbr.rel (0) target = $region5
  $region4: #{preact_basic_block.3} parent=0 // pred_region
    _
  $region5: #{preact_basic_block.3} parent=0 // pred_fallthru
    _
  // Predicated region
  $region6: #{preact_basic_block.3} parent=0 // pred_check
    _
  $region7: #{preact_basic_block.3} parent=0 // pred_check_branch
    %12 = sbr.rel (0) target = $region9
  $region8: #{preact_basic_block.3} parent=0 // pred_region
    _
  $region9: #{preact_basic_block.3} parent=0 // pred_fallthru
    _
  // Predicated region
  $region10: #{preact_basic_block.3} parent=0 // pred_check
    _
  $region11: #{preact_basic_block.3} parent=0 // pred_check_branch
    %14 = sbr.rel (0) target = $region13
  $region12: #{preact_basic_block.3} parent=0 // pred_region
    _
  $region13: #{preact_basic_block.3} parent=0 // pred_fallthru
    _
  // Predicated region
  $region14: #{preact_basic_block.3} parent=0 // pred_check
    _
  $region15: #{preact_basic_block.3} parent=0 // pred_check_branch
    %16 = sbr.rel (0) target = $region17
  $region16: #{preact_basic_block.3} parent=0 // pred_region
    _
  $region17: #{preact_basic_block.3} parent=0 // pred_fallthru
    _
  %p17 = scmp.eq.s32.totalorder 0, 0
  // Predicated region
  $region18: #{preact_basic_block.3} parent=0 // pred_check
    %p18 = pneg %p17
  $region19: #{preact_basic_block.3} parent=0 // pred_check_branch
    %20 = sbr.rel (%p18) target = $region21
  $region20: #{preact_basic_block.3} parent=0 // pred_region
    %v21 = vld [vmem:[%s2] sm:$0xff]
    %v22 = vld [vmem:[%s3] sm:$0xf]
    %vm23 = vcmask 31744
    %v25 = vsel %vm23, %v21, 0
    %vm27 = vcmask 1043456
    %v29 = vsel %vm27, %v22, 0
    %31 = vmatprep.subr.mxu0 0.0
    %32 = vmatpush1.msra.mxu0 0.0
    %33 = vmatprep.subr.mxu0 0.0
    %34 = vmatpush1.msra.mxu0 0.0
    %35 = vmatprep.subr.mxu0 0.0
    %36 = vmatpush1.msra.mxu0 0.0
    %37 = vmatprep.subr.mxu0 0.0
    %38 = vmatpush1.msra.mxu0 0.0
    %39 = vmatprep.subr.mxu0 0.0
    %40 = vmatpush1.msra.mxu0 0.0
    %41 = vmatprep.subr.mxu0 0.0
    %42 = vmatpush1.msra.mxu0 0.0
    %43 = vmatprep.subr.mxu0 0.0
    %44 = vmatpush1.msra.mxu0 0.0
    %45 = vmatprep.subr.mxu0 0.0
    %46 = vmatpush1.msra.mxu0 0.0
    %47 = vmatprep.subr.mxu0 0.0
    %48 = vmatpush1.msra.mxu0 0.0
    %49 = vmatprep.subr.mxu0 0.0
    %50 = vmatpush1.msra.mxu0 0.0
    %51 = vmatprep.subr.mxu0 0.0
    %52 = vmatpush1.msra.mxu0 0.0
    %53 = vmatprep.subr.mxu0 0.0
    %54 = vmatpush1.msra.mxu0 0.0
    %55 = vmatprep.subr.mxu0 0.0
    %56 = vmatpush1.msra.mxu0 0.0
    %57 = vmatprep.subr.mxu0 0.0
    %58 = vmatpush1.msra.mxu0 0.0
    %59 = vmatprep.subr.mxu0 0.0
    %60 = vmatpush1.msra.mxu0 0.0
    %61 = vmatprep.subr.mxu0 0.0
    %62 = vmatpush1.msra.mxu0 %v29
    %63 = vmatprep.subr.mxu0 0.0
    %64 = vmatpush2.msra.mxu0 0.0
    %65 = vmatprep.subr.mxu0 0.0
    %66 = vmatpush2.msra.mxu0 0.0
    %67 = vmatprep.subr.mxu0 0.0
    %68 = vmatpush2.msra.mxu0 0.0
    %69 = vmatprep.subr.mxu0 0.0
    %70 = vmatpush2.msra.mxu0 0.0
    %71 = vmatprep.subr.mxu0 0.0
    %72 = vmatpush2.msra.mxu0 0.0
    %73 = vmatprep.subr.mxu0 0.0
    %74 = vmatpush2.msra.mxu0 0.0
    %75 = vmatprep.subr.mxu0 0.0
    %76 = vmatpush2.msra.mxu0 0.0
    %77 = vmatprep.subr.mxu0 0.0
    %78 = vmatpush2.msra.mxu0 0.0
    %79 = vmatprep.subr.mxu0 0.0
    %80 = vmatpush2.msra.mxu0 0.0
    %81 = vmatprep.subr.mxu0 0.0
    %82 = vmatpush2.msra.mxu0 0.0
    %83 = vmatprep.subr.mxu0 0.0
    %84 = vmatpush2.msra.mxu0 0.0
    %85 = vmatprep.subr.mxu0 0.0
    %86 = vmatpush2.msra.mxu0 0.0
    %87 = vmatprep.subr.mxu0 0.0
    %88 = vmatpush2.msra.mxu0 0.0
    %89 = vmatprep.subr.mxu0 0.0
    %90 = vmatpush2.msra.mxu0 0.0
    %91 = vmatprep.subr.mxu0 0.0
    %92 = vmatpush2.msra.mxu0 0.0
    %93 = vmatprep.subr.mxu0 0.0
    %94 = vmatpush2.msra.mxu0 0.0
    %95 = vmatprep.mubr.f32.mxu0 0.0
    %96 = vmatmul.mubr.f32.gmra.mxu0 %v25
    %v97 = vpop.f32.mrf.mxu0
    %v98 = vadd.f32 0.0, %v97
    %v99 = vpop.f32.mrf.mxu0
    %100 = vdwg.mxu0
    %101 = vst [vmem:[%s4] sm:$0xff] %v98
  $region21: #{preact_basic_block.3} parent=0 // pred_fallthru
    _
  %v102 = vld [vmem:[%s4] sm:$0xff]
  %v103 = vld [vmem:[%s0] sm:$0xff]
  %v104 = vld [vmem:[%s1] sm:$0xff]
  %v105 = vld [vmem:[%s1 + $0x8] sm:$0xff]
  %v106 = vld [vmem:[%s1 + $0x10] sm:$0xff]
  %v107 = vld [vmem:[%s1 + $0x18] sm:$0xff]
  %v108 = vld [vmem:[%s1 + $0x20] sm:$0xff]
  %v109 = vld [vmem:[%s1 + $0x28] sm:$0xff]
  %v110 = vld [vmem:[%s1 + $0x30] sm:$0xff]
  %v111 = vld [vmem:[%s1 + $0x38] sm:$0xff]
  %v112 = vld [vmem:[%s1 + $0x40] sm:$0xff]
  %vm113 = vcmask 588800
  %v115 = vsel %vm113, %v103, 0
  %117 = vmatprep.subr.mxu0 0.0
  %118 = vmatpush1.msra.mxu0 0.0
  %119 = vmatprep.subr.mxu0 0.0
  %120 = vmatpush1.msra.mxu0 0.0
  %121 = vmatprep.subr.mxu0 0.0
  %122 = vmatpush1.msra.mxu0 0.0
  %123 = vmatprep.subr.mxu0 0.0
  %124 = vmatpush1.msra.mxu0 0.0
  %125 = vmatprep.subr.mxu0 0.0
  %126 = vmatpush1.msra.mxu0 0.0
  %127 = vmatprep.subr.mxu0 0.0
  %128 = vmatpush1.msra.mxu0 0.0
  %129 = vmatprep.subr.mxu0 0.0
  %130 = vmatpush1.msra.mxu0 0.0
  %131 = vmatprep.subr.mxu0 0.0
  %132 = vmatpush1.msra.mxu0 %v112
  %133 = vmatprep.subr.mxu0 0.0
  %134 = vmatpush1.msra.mxu0 %v111
  %135 = vmatprep.subr.mxu0 0.0
  %136 = vmatpush1.msra.mxu0 %v110
  %137 = vmatprep.subr.mxu0 0.0
  %138 = vmatpush1.msra.mxu0 %v109
  %139 = vmatprep.subr.mxu0 0.0
  %140 = vmatpush1.msra.mxu0 %v108
  %141 = vmatprep.subr.mxu0 0.0
  %142 = vmatpush1.msra.mxu0 %v107
  %143 = vmatprep.subr.mxu0 0.0
  %144 = vmatpush1.msra.mxu0 %v106
  %145 = vmatprep.subr.mxu0 0.0
  %146 = vmatpush1.msra.mxu0 %v105
  %147 = vmatprep.subr.mxu0 0.0
  %148 = vmatpush1.msra.mxu0 %v104
  %149 = vmatprep.subr.mxu0 0.0
  %150 = vmatpush2.msra.mxu0 0.0
  %151 = vmatprep.subr.mxu0 0.0
  %152 = vmatpush2.msra.mxu0 0.0
  %153 = vmatprep.subr.mxu0 0.0
  %154 = vmatpush2.msra.mxu0 0.0
  %155 = vmatprep.subr.mxu0 0.0
  %156 = vmatpush2.msra.mxu0 0.0
  %157 = vmatprep.subr.mxu0 0.0
  %158 = vmatpush2.msra.mxu0 0.0
  %159 = vmatprep.subr.mxu0 0.0
  %160 = vmatpush2.msra.mxu0 0.0
  %161 = vmatprep.subr.mxu0 0.0
  %162 = vmatpush2.msra.mxu0 0.0
  %163 = vmatprep.subr.mxu0 0.0
  %164 = vmatpush2.msra.mxu0 0.0
  %165 = vmatprep.subr.mxu0 0.0
  %166 = vmatpush2.msra.mxu0 0.0
  %167 = vmatprep.subr.mxu0 0.0
  %168 = vmatpush2.msra.mxu0 0.0
  %169 = vmatprep.subr.mxu0 0.0
  %170 = vmatpush2.msra.mxu0 0.0
  %171 = vmatprep.subr.mxu0 0.0
  %172 = vmatpush2.msra.mxu0 0.0
  %173 = vmatprep.subr.mxu0 0.0
  %174 = vmatpush2.msra.mxu0 0.0
  %175 = vmatprep.subr.mxu0 0.0
  %176 = vmatpush2.msra.mxu0 0.0
  %177 = vmatprep.subr.mxu0 0.0
  %178 = vmatpush2.msra.mxu0 0.0
  %179 = vmatprep.subr.mxu0 0.0
  %180 = vmatpush2.msra.mxu0 0.0
  %181 = vmatprep.mubr.f32.mxu0 0.0
  %182 = vmatmul.mubr.f32.gmra.mxu0 %v115
  %v183 = vpop.f32.mrf.mxu0
  %v184 = vadd.f32 0.0, %v183
  %v185 = vpop.f32.mrf.mxu0
  %186 = vdwg.mxu0
  %v187 = vadd.f32 %v102, %v184
  %188 = vst [vmem:[%s4] sm:$0xff] %v187
  // Predicated region
  $region22: #{preact_basic_block.3} parent=0 // pred_check
    _
  $region23: #{preact_basic_block.3} parent=0 // pred_check_branch
    %190 = sbr.rel (0) target = $region25
  $region24: #{preact_basic_block.3} parent=0 // pred_region
    _
  $region25: #{preact_basic_block.3} parent=0 // pred_fallthru
    _
  // Predicated region
  $region26: #{preact_basic_block.3} parent=0 // pred_check
    _
  $region27: #{preact_basic_block.3} parent=0 // pred_check_branch
    %192 = sbr.rel (0) target = $region29
  $region28: #{preact_basic_block.3} parent=0 // pred_region
    _
  $region29: #{preact_basic_block.3} parent=0 // pred_fallthru
    _

</llo_original>
